<compile_context>
chip_gen: v7x
topology: tpu7x:2x2x1
jax: 0.10.0
libtpu: 0.0.40
codegen_flags: <defaults>
</compile_context>

<pallas_src>
import jax
import jax.numpy as jnp
from jax.experimental import pallas as pl
from jax.experimental.pallas import tpu as pltpu

BATCH = 8
INPUT_DIM = 256
HIDDEN_DIM = 128
LATENT_DIM = 128
EPS = 0.1


def _swish(z):
    return z * jax.nn.sigmoid(z)


def _layernorm_kernel(z, gamma, beta):
    # var = E[z^2] - m^2: the two XLU reductions are independent and overlap.
    m = jnp.mean(z, axis=-1, keepdims=True)
    ms = jnp.mean(z * z, axis=-1, keepdims=True)
    v = ms - m * m
    return (z - m) * jax.lax.rsqrt(v + EPS) * gamma + beta


def _layernorm_ref(z, gamma, beta):
    # Torch-style biased variance for the reference (validates the E[z^2]-m^2 form).
    m = jnp.mean(z, axis=-1, keepdims=True)
    v = jnp.mean(jnp.square(z - m), axis=-1, keepdims=True)
    return (z - m) * jax.lax.rsqrt(v + EPS) * gamma + beta


def encoder_kernel(x_ref, w1_ref, wh_ref, vec_ref, whead_ref, mu_ref, lv_ref):
    bf16 = jnp.bfloat16
    x = x_ref[...]                                               # [tb,256] f32

    # Per-row L2 scale, applied after the first matmul (commutes with the
    # contraction).  No epsilon by design (torch parity): all-zero rows
    # (including zero-padded tail rows of the last grid step) produce NaN and
    # are never written back.
    s = jax.lax.rsqrt(jnp.sum(x * x, axis=-1, keepdims=True))    # [tb,1]

    # dropout: identity (eval mode)

    def bias(i):
        return vec_ref[i:i + 1, :]            # [1,128], broadcasts over batch

    def gamma(i):
        return vec_ref[5 + i:6 + i, :]

    def beta(i):
        return vec_ref[10 + i:11 + i, :]

    # Layer 1: input_dim -> hidden_dim (bf16 operands, f32 accumulation).
    z = (jnp.dot(x.astype(bf16), w1_ref[...],
                 preferred_element_type=jnp.float32) * s + bias(0))
    h = _layernorm_kernel(_swish(z), gamma(0), beta(0))

    # Layers 2..5 with running residual accumulator res = h1 + ... + h_{k-1}.
    res = h
    for i in range(4):
        z = (jnp.dot(h.astype(bf16), wh_ref[i],
                     preferred_element_type=jnp.float32)
             + bias(i + 1) + res)
        h = _layernorm_kernel(_swish(z), gamma(i + 1), beta(i + 1))
        if i < 3:
            res = res + h

    # Fused mu|logvar head: one [tb,128] x [128,256] matmul, then two
    # lane-dense 128-wide stores (slice boundary is lane-tile aligned).
    head = jnp.dot(h.astype(bf16), whead_ref[...],
                   preferred_element_type=jnp.float32)           # [tb,256]
    mu_ref[...] = head[:, :LATENT_DIM] + vec_ref[15:16, :]
    lv_ref[...] = head[:, LATENT_DIM:] + vec_ref[16:17, :]


def encoder_forward(x, packed, block_batch=256):
    """packed = (w1, wh, vecs, whead); returns (mu, logvar).

    block_batch: 128 recommended on v5e (single vst slot -> spill-store bound
    at 256), 256-512 on v6e/v7x.
    """
    w1, wh, vecs, whead = packed
    B = x.shape[0]
    if B <= block_batch:
        tb = B
        # v7x: prefer >=2 grid steps so ("parallel",) shards the batch across
        # both TensorCores -- only when the halves stay sublane-aligned.
        if B >= 16 and (B // 2) % 8 == 0:
            tb = B // 2
    else:
        tb = block_batch
    grid = (pl.cdiv(B, tb),)

    in_specs = [
        pl.BlockSpec((tb, INPUT_DIM), lambda i: (i, 0)),                    # x
        pl.BlockSpec((INPUT_DIM, HIDDEN_DIM), lambda i: (0, 0)),            # w1
        pl.BlockSpec((4, HIDDEN_DIM, HIDDEN_DIM), lambda i: (0, 0, 0)),     # wh
        pl.BlockSpec((17, HIDDEN_DIM), lambda i: (0, 0)),                   # vecs
        pl.BlockSpec((HIDDEN_DIM, 2 * LATENT_DIM), lambda i: (0, 0)),       # whead
    ]
    out_specs = (
        pl.BlockSpec((tb, LATENT_DIM), lambda i: (i, 0)),                   # mu
        pl.BlockSpec((tb, LATENT_DIM), lambda i: (i, 0)),                   # logvar
    )
    mu, logvar = pl.pallas_call(
        encoder_kernel,
        out_shape=(jax.ShapeDtypeStruct((B, LATENT_DIM), jnp.float32),
                   jax.ShapeDtypeStruct((B, LATENT_DIM), jnp.float32)),
        grid=grid,
        in_specs=in_specs,
        out_specs=out_specs,
        compiler_params=pltpu.CompilerParams(
            dimension_semantics=("parallel",)),
    )(x, w1, wh, vecs, whead)
    return mu, logvar


def make_params(key):
    """Deterministic synthetic parameters matching Encoder.__init__ shapes (f32)."""
    params = []
    dims = [(INPUT_DIM, HIDDEN_DIM)] + [(HIDDEN_DIM, HIDDEN_DIM)] * 4
    for i, (din, dout) in enumerate(dims):
        kw, kb, kg, kbe = jax.random.split(jax.random.fold_in(key, i), 4)
        params += [
            jax.random.normal(kw, (din, dout), jnp.float32) * 0.05,        # W (pre-transposed)
            jax.random.normal(kb, (1, dout), jnp.float32) * 0.02,          # bias
            1.0 + jax.random.normal(kg, (1, dout), jnp.float32) * 0.02,    # LN gamma
            jax.random.normal(kbe, (1, dout), jnp.float32) * 0.02,         # LN beta
        ]
    for i in (100, 101):  # mu head, logvar head
        kw, kb = jax.random.split(jax.random.fold_in(key, i), 2)
        params += [
            jax.random.normal(kw, (HIDDEN_DIM, LATENT_DIM), jnp.float32) * 0.05,
            jax.random.normal(kb, (1, LATENT_DIM), jnp.float32) * 0.02,
        ]
    return params


def pack_params(params):
    """Pack 24 torch-shaped params into 4 arrays; matmul weights stored bf16."""
    (w1, b1, g1, be1, w2, b2, g2, be2, w3, b3, g3, be3,
     w4, b4, g4, be4, w5, b5, g5, be5, wmu, bmu, wlv, blv) = params
    bf16 = jnp.bfloat16
    w1b = w1.astype(bf16)                                           # [256,128]
    wh = jnp.stack([w2, w3, w4, w5], axis=0).astype(bf16)           # [4,128,128]
    vecs = jnp.concatenate([b1, b2, b3, b4, b5,
                            g1, g2, g3, g4, g5,
                            be1, be2, be3, be4, be5,
                            bmu, blv], axis=0)                      # [17,128] f32
    whead = jnp.concatenate([wmu, wlv], axis=1).astype(bf16)        # [128,256]
    return w1b, wh, vecs, whead


def reference_forward(x, params):
    """Pure-JAX f32 reference mirroring the PyTorch forward (eval mode)."""
    (w1, b1, g1, be1, w2, b2, g2, be2, w3, b3, g3, be3,
     w4, b4, g4, be4, w5, b5, g5, be5, wmu, bmu, wlv, blv) = params
    norm = jnp.sqrt(jnp.sum(x * x, axis=-1, keepdims=True))
    x = x / norm
    h1 = _layernorm_ref(_swish(x @ w1 + b1), g1, be1)
    h2 = _layernorm_ref(_swish(h1 @ w2 + b2 + h1), g2, be2)
    h3 = _layernorm_ref(_swish(h2 @ w3 + b3 + h1 + h2), g3, be3)
    h4 = _layernorm_ref(_swish(h3 @ w4 + b4 + h1 + h2 + h3), g4, be4)
    h5 = _layernorm_ref(_swish(h4 @ w5 + b5 + h1 + h2 + h3 + h4), g5, be5)
    return h5 @ wmu + bmu, h5 @ wlv + blv


if __name__ == "__main__":
    key = jax.random.PRNGKey(0)
    kx, kp = jax.random.split(key)
    x = jax.random.normal(kx, (BATCH, INPUT_DIM), jnp.float32)
    params = make_params(kp)
    packed = pack_params(params)

    mu, logvar = encoder_forward(x, packed)
    jax.block_until_ready((mu, logvar))

    mu_ref, lv_ref = reference_forward(x, params)
    # Loosened tolerance: matmul operands are bf16 (f32 accumulation); LN with
    # eps=0.1 keeps the per-layer error bounded, observed error is ~1e-2 class.
    assert jnp.allclose(mu, mu_ref, atol=5e-2, rtol=5e-2)
    assert jnp.allclose(logvar, lv_ref, atol=5e-2, rtol=5e-2)
    assert mu.shape == (BATCH, LATENT_DIM) and logvar.shape == (BATCH, LATENT_DIM)

    print("KERNEL_OK")
</pallas_src>

<mosaic_0001>
module attributes {stable_mosaic.version = 11 : i64} {
  func.func @encoder_kernel(%arg0: i32, %arg1: memref<8x256xf32, #tpu.memory_space<vmem>>, %arg2: memref<256x128xbf16, #tpu.memory_space<vmem>>, %arg3: memref<4x128x128xbf16, #tpu.memory_space<vmem>>, %arg4: memref<17x128xf32, #tpu.memory_space<vmem>>, %arg5: memref<128x256xbf16, #tpu.memory_space<vmem>>, %arg6: memref<8x128xf32, #tpu.memory_space<vmem>>, %arg7: memref<8x128xf32, #tpu.memory_space<vmem>>) attributes {dimension_semantics = [#tpu.dimension_semantics<parallel>], iteration_bounds = array<i64: 1>, scalar_prefetch = 0 : i64, scratch_operands = 0 : i64, tpu.core_type = #tpu.core_type<tc>, window_params = [{transform_indices = @transform_0, window_bounds = array<i64: 8, 256>}, {pipeline_mode = #tpu.pipeline_mode<synchronous>, transform_indices = @transform_1, window_bounds = array<i64: 256, 128>}, {pipeline_mode = #tpu.pipeline_mode<synchronous>, transform_indices = @transform_2, window_bounds = array<i64: 4, 128, 128>}, {pipeline_mode = #tpu.pipeline_mode<synchronous>, transform_indices = @transform_3, window_bounds = array<i64: 17, 128>}, {pipeline_mode = #tpu.pipeline_mode<synchronous>, transform_indices = @transform_4, window_bounds = array<i64: 128, 256>}, {transform_indices = @transform_5, window_bounds = array<i64: 8, 128>}, {transform_indices = @transform_6, window_bounds = array<i64: 8, 128>}]} {
    %c0 = arith.constant 0 : index
    %c0_0 = arith.constant 0 : index
    %0 = vector.load %arg1[%c0, %c0_0] : memref<8x256xf32, #tpu.memory_space<vmem>>, vector<8x256xf32>
    %1 = arith.mulf %0, %0 : vector<8x256xf32>
    %cst = arith.constant dense<0.000000e+00> : vector<8xf32>
    %2 = vector.multi_reduction <add>, %1, %cst [1] : vector<8x256xf32> to vector<8xf32>
    %3 = vector.shape_cast %2 : vector<8xf32> to vector<8x1xf32>
    %4 = math.rsqrt %3 : vector<8x1xf32>
    %5 = arith.truncf %0 : vector<8x256xf32> to vector<8x256xbf16>
    %c0_1 = arith.constant 0 : index
    %c0_2 = arith.constant 0 : index
    %6 = vector.load %arg2[%c0_1, %c0_2] : memref<256x128xbf16, #tpu.memory_space<vmem>>, vector<256x128xbf16>
    %cst_3 = arith.constant dense<0.000000e+00> : vector<8x128xf32>
    %7 = tpu.matmul %5, %6, %cst_3 {dimension_numbers = #tpu.dot_dimension_numbers<[1], [0], [0], [1], [0, 0, 1, 1], [], []>} : vector<8x256xbf16>, vector<256x128xbf16>, vector<8x128xf32> -> vector<8x128xf32>
    %8 = vector.broadcast %4 : vector<8x1xf32> to vector<8x128xf32>
    %9 = arith.mulf %7, %8 : vector<8x128xf32>
    %c0_4 = arith.constant 0 : index
    %c0_5 = arith.constant 0 : index
    %10 = vector.load %arg4[%c0_4, %c0_5] : memref<17x128xf32, #tpu.memory_space<vmem>>, vector<1x128xf32>
    %11 = vector.broadcast %10 : vector<1x128xf32> to vector<8x128xf32>
    %12 = arith.addf %9, %11 : vector<8x128xf32>
    %13 = arith.negf %12 : vector<8x128xf32>
    %14 = math.exp %13 : vector<8x128xf32>
    %cst_6 = arith.constant 1.000000e+00 : f32
    %15 = vector.broadcast %cst_6 : f32 to vector<8x128xf32>
    %16 = arith.addf %15, %14 : vector<8x128xf32>
    %17 = arith.divf %15, %16 : vector<8x128xf32>
    %18 = arith.mulf %12, %17 : vector<8x128xf32>
    %c5 = arith.constant 5 : index
    %c0_7 = arith.constant 0 : index
    %19 = vector.load %arg4[%c5, %c0_7] : memref<17x128xf32, #tpu.memory_space<vmem>>, vector<1x128xf32>
    %c10 = arith.constant 10 : index
    %c0_8 = arith.constant 0 : index
    %20 = vector.load %arg4[%c10, %c0_8] : memref<17x128xf32, #tpu.memory_space<vmem>>, vector<1x128xf32>
    %cst_9 = arith.constant dense<0.000000e+00> : vector<8xf32>
    %21 = vector.multi_reduction <add>, %18, %cst_9 [1] : vector<8x128xf32> to vector<8xf32>
    %22 = vector.shape_cast %21 : vector<8xf32> to vector<8x1xf32>
    %cst_10 = arith.constant 1.280000e+02 : f32
    %23 = vector.broadcast %cst_10 : f32 to vector<8x1xf32>
    %24 = arith.divf %22, %23 : vector<8x1xf32>
    %25 = arith.mulf %18, %18 : vector<8x128xf32>
    %cst_11 = arith.constant dense<0.000000e+00> : vector<8xf32>
    %26 = vector.multi_reduction <add>, %25, %cst_11 [1] : vector<8x128xf32> to vector<8xf32>
    %27 = vector.shape_cast %26 : vector<8xf32> to vector<8x1xf32>
    %cst_12 = arith.constant 1.280000e+02 : f32
    %28 = vector.broadcast %cst_12 : f32 to vector<8x1xf32>
    %29 = arith.divf %27, %28 : vector<8x1xf32>
    %30 = arith.mulf %24, %24 : vector<8x1xf32>
    %31 = arith.subf %29, %30 : vector<8x1xf32>
    %32 = vector.broadcast %24 : vector<8x1xf32> to vector<8x128xf32>
    %33 = arith.subf %18, %32 : vector<8x128xf32>
    %cst_13 = arith.constant 1.000000e-01 : f32
    %34 = vector.broadcast %cst_13 : f32 to vector<8x1xf32>
    %35 = arith.addf %31, %34 : vector<8x1xf32>
    %36 = math.rsqrt %35 : vector<8x1xf32>
    %37 = vector.broadcast %36 : vector<8x1xf32> to vector<8x128xf32>
    %38 = arith.mulf %33, %37 : vector<8x128xf32>
    %39 = vector.broadcast %19 : vector<1x128xf32> to vector<8x128xf32>
    %40 = arith.mulf %38, %39 : vector<8x128xf32>
    %41 = vector.broadcast %20 : vector<1x128xf32> to vector<8x128xf32>
    %42 = arith.addf %40, %41 : vector<8x128xf32>
    %43 = arith.truncf %42 : vector<8x128xf32> to vector<8x128xbf16>
    %c0_14 = arith.constant 0 : index
    %c0_15 = arith.constant 0 : index
    %c0_16 = arith.constant 0 : index
    %44 = vector.load %arg3[%c0_14, %c0_15, %c0_16] : memref<4x128x128xbf16, #tpu.memory_space<vmem>>, vector<1x128x128xbf16>
    %45 = vector.shape_cast %44 : vector<1x128x128xbf16> to vector<128x128xbf16>
    %cst_17 = arith.constant dense<0.000000e+00> : vector<8x128xf32>
    %46 = tpu.matmul %43, %45, %cst_17 {dimension_numbers = #tpu.dot_dimension_numbers<[1], [0], [0], [1], [0, 0, 1, 1], [], []>} : vector<8x128xbf16>, vector<128x128xbf16>, vector<8x128xf32> -> vector<8x128xf32>
    %c1 = arith.constant 1 : index
    %c0_18 = arith.constant 0 : index
    %47 = vector.load %arg4[%c1, %c0_18] : memref<17x128xf32, #tpu.memory_space<vmem>>, vector<1x128xf32>
    %48 = vector.broadcast %47 : vector<1x128xf32> to vector<8x128xf32>
    %49 = arith.addf %46, %48 : vector<8x128xf32>
    %50 = arith.addf %49, %42 : vector<8x128xf32>
    %51 = arith.negf %50 : vector<8x128xf32>
    %52 = math.exp %51 : vector<8x128xf32>
    %cst_19 = arith.constant 1.000000e+00 : f32
    %53 = vector.broadcast %cst_19 : f32 to vector<8x128xf32>
    %54 = arith.addf %53, %52 : vector<8x128xf32>
    %55 = arith.divf %53, %54 : vector<8x128xf32>
    %56 = arith.mulf %50, %55 : vector<8x128xf32>
    %c6 = arith.constant 6 : index
    %c0_20 = arith.constant 0 : index
    %57 = vector.load %arg4[%c6, %c0_20] : memref<17x128xf32, #tpu.memory_space<vmem>>, vector<1x128xf32>
    %c11 = arith.constant 11 : index
    %c0_21 = arith.constant 0 : index
    %58 = vector.load %arg4[%c11, %c0_21] : memref<17x128xf32, #tpu.memory_space<vmem>>, vector<1x128xf32>
    %cst_22 = arith.constant dense<0.000000e+00> : vector<8xf32>
    %59 = vector.multi_reduction <add>, %56, %cst_22 [1] : vector<8x128xf32> to vector<8xf32>
    %60 = vector.shape_cast %59 : vector<8xf32> to vector<8x1xf32>
    %cst_23 = arith.constant 1.280000e+02 : f32
    %61 = vector.broadcast %cst_23 : f32 to vector<8x1xf32>
    %62 = arith.divf %60, %61 : vector<8x1xf32>
    %63 = arith.mulf %56, %56 : vector<8x128xf32>
    %cst_24 = arith.constant dense<0.000000e+00> : vector<8xf32>
    %64 = vector.multi_reduction <add>, %63, %cst_24 [1] : vector<8x128xf32> to vector<8xf32>
    %65 = vector.shape_cast %64 : vector<8xf32> to vector<8x1xf32>
    %cst_25 = arith.constant 1.280000e+02 : f32
    %66 = vector.broadcast %cst_25 : f32 to vector<8x1xf32>
    %67 = arith.divf %65, %66 : vector<8x1xf32>
    %68 = arith.mulf %62, %62 : vector<8x1xf32>
    %69 = arith.subf %67, %68 : vector<8x1xf32>
    %70 = vector.broadcast %62 : vector<8x1xf32> to vector<8x128xf32>
    %71 = arith.subf %56, %70 : vector<8x128xf32>
    %cst_26 = arith.constant 1.000000e-01 : f32
    %72 = vector.broadcast %cst_26 : f32 to vector<8x1xf32>
    %73 = arith.addf %69, %72 : vector<8x1xf32>
    %74 = math.rsqrt %73 : vector<8x1xf32>
    %75 = vector.broadcast %74 : vector<8x1xf32> to vector<8x128xf32>
    %76 = arith.mulf %71, %75 : vector<8x128xf32>
    %77 = vector.broadcast %57 : vector<1x128xf32> to vector<8x128xf32>
    %78 = arith.mulf %76, %77 : vector<8x128xf32>
    %79 = vector.broadcast %58 : vector<1x128xf32> to vector<8x128xf32>
    %80 = arith.addf %78, %79 : vector<8x128xf32>
    %81 = arith.addf %42, %80 : vector<8x128xf32>
    %82 = arith.truncf %80 : vector<8x128xf32> to vector<8x128xbf16>
    %c1_27 = arith.constant 1 : index
    %c0_28 = arith.constant 0 : index
    %c0_29 = arith.constant 0 : index
    %83 = vector.load %arg3[%c1_27, %c0_28, %c0_29] : memref<4x128x128xbf16, #tpu.memory_space<vmem>>, vector<1x128x128xbf16>
    %84 = vector.shape_cast %83 : vector<1x128x128xbf16> to vector<128x128xbf16>
    %cst_30 = arith.constant dense<0.000000e+00> : vector<8x128xf32>
    %85 = tpu.matmul %82, %84, %cst_30 {dimension_numbers = #tpu.dot_dimension_numbers<[1], [0], [0], [1], [0, 0, 1, 1], [], []>} : vector<8x128xbf16>, vector<128x128xbf16>, vector<8x128xf32> -> vector<8x128xf32>
    %c2 = arith.constant 2 : index
    %c0_31 = arith.constant 0 : index
    %86 = vector.load %arg4[%c2, %c0_31] : memref<17x128xf32, #tpu.memory_space<vmem>>, vector<1x128xf32>
    %87 = vector.broadcast %86 : vector<1x128xf32> to vector<8x128xf32>
    %88 = arith.addf %85, %87 : vector<8x128xf32>
    %89 = arith.addf %88, %81 : vector<8x128xf32>
    %90 = arith.negf %89 : vector<8x128xf32>
    %91 = math.exp %90 : vector<8x128xf32>
    %cst_32 = arith.constant 1.000000e+00 : f32
    %92 = vector.broadcast %cst_32 : f32 to vector<8x128xf32>
    %93 = arith.addf %92, %91 : vector<8x128xf32>
    %94 = arith.divf %92, %93 : vector<8x128xf32>
    %95 = arith.mulf %89, %94 : vector<8x128xf32>
    %c7 = arith.constant 7 : index
    %c0_33 = arith.constant 0 : index
    %96 = vector.load %arg4[%c7, %c0_33] : memref<17x128xf32, #tpu.memory_space<vmem>>, vector<1x128xf32>
    %c12 = arith.constant 12 : index
    %c0_34 = arith.constant 0 : index
    %97 = vector.load %arg4[%c12, %c0_34] : memref<17x128xf32, #tpu.memory_space<vmem>>, vector<1x128xf32>
    %cst_35 = arith.constant dense<0.000000e+00> : vector<8xf32>
    %98 = vector.multi_reduction <add>, %95, %cst_35 [1] : vector<8x128xf32> to vector<8xf32>
    %99 = vector.shape_cast %98 : vector<8xf32> to vector<8x1xf32>
    %cst_36 = arith.constant 1.280000e+02 : f32
    %100 = vector.broadcast %cst_36 : f32 to vector<8x1xf32>
    %101 = arith.divf %99, %100 : vector<8x1xf32>
    %102 = arith.mulf %95, %95 : vector<8x128xf32>
    %cst_37 = arith.constant dense<0.000000e+00> : vector<8xf32>
    %103 = vector.multi_reduction <add>, %102, %cst_37 [1] : vector<8x128xf32> to vector<8xf32>
    %104 = vector.shape_cast %103 : vector<8xf32> to vector<8x1xf32>
    %cst_38 = arith.constant 1.280000e+02 : f32
    %105 = vector.broadcast %cst_38 : f32 to vector<8x1xf32>
    %106 = arith.divf %104, %105 : vector<8x1xf32>
    %107 = arith.mulf %101, %101 : vector<8x1xf32>
    %108 = arith.subf %106, %107 : vector<8x1xf32>
    %109 = vector.broadcast %101 : vector<8x1xf32> to vector<8x128xf32>
    %110 = arith.subf %95, %109 : vector<8x128xf32>
    %cst_39 = arith.constant 1.000000e-01 : f32
    %111 = vector.broadcast %cst_39 : f32 to vector<8x1xf32>
    %112 = arith.addf %108, %111 : vector<8x1xf32>
    %113 = math.rsqrt %112 : vector<8x1xf32>
    %114 = vector.broadcast %113 : vector<8x1xf32> to vector<8x128xf32>
    %115 = arith.mulf %110, %114 : vector<8x128xf32>
    %116 = vector.broadcast %96 : vector<1x128xf32> to vector<8x128xf32>
    %117 = arith.mulf %115, %116 : vector<8x128xf32>
    %118 = vector.broadcast %97 : vector<1x128xf32> to vector<8x128xf32>
    %119 = arith.addf %117, %118 : vector<8x128xf32>
    %120 = arith.addf %81, %119 : vector<8x128xf32>
    %121 = arith.truncf %119 : vector<8x128xf32> to vector<8x128xbf16>
    %c2_40 = arith.constant 2 : index
    %c0_41 = arith.constant 0 : index
    %c0_42 = arith.constant 0 : index
    %122 = vector.load %arg3[%c2_40, %c0_41, %c0_42] : memref<4x128x128xbf16, #tpu.memory_space<vmem>>, vector<1x128x128xbf16>
    %123 = vector.shape_cast %122 : vector<1x128x128xbf16> to vector<128x128xbf16>
    %cst_43 = arith.constant dense<0.000000e+00> : vector<8x128xf32>
    %124 = tpu.matmul %121, %123, %cst_43 {dimension_numbers = #tpu.dot_dimension_numbers<[1], [0], [0], [1], [0, 0, 1, 1], [], []>} : vector<8x128xbf16>, vector<128x128xbf16>, vector<8x128xf32> -> vector<8x128xf32>
    %c3 = arith.constant 3 : index
    %c0_44 = arith.constant 0 : index
    %125 = vector.load %arg4[%c3, %c0_44] : memref<17x128xf32, #tpu.memory_space<vmem>>, vector<1x128xf32>
    %126 = vector.broadcast %125 : vector<1x128xf32> to vector<8x128xf32>
    %127 = arith.addf %124, %126 : vector<8x128xf32>
    %128 = arith.addf %127, %120 : vector<8x128xf32>
    %129 = arith.negf %128 : vector<8x128xf32>
    %130 = math.exp %129 : vector<8x128xf32>
    %cst_45 = arith.constant 1.000000e+00 : f32
    %131 = vector.broadcast %cst_45 : f32 to vector<8x128xf32>
    %132 = arith.addf %131, %130 : vector<8x128xf32>
    %133 = arith.divf %131, %132 : vector<8x128xf32>
    %134 = arith.mulf %128, %133 : vector<8x128xf32>
    %c8 = arith.constant 8 : index
    %c0_46 = arith.constant 0 : index
    %135 = vector.load %arg4[%c8, %c0_46] : memref<17x128xf32, #tpu.memory_space<vmem>>, vector<1x128xf32>
    %c13 = arith.constant 13 : index
    %c0_47 = arith.constant 0 : index
    %136 = vector.load %arg4[%c13, %c0_47] : memref<17x128xf32, #tpu.memory_space<vmem>>, vector<1x128xf32>
    %cst_48 = arith.constant dense<0.000000e+00> : vector<8xf32>
    %137 = vector.multi_reduction <add>, %134, %cst_48 [1] : vector<8x128xf32> to vector<8xf32>
    %138 = vector.shape_cast %137 : vector<8xf32> to vector<8x1xf32>
    %cst_49 = arith.constant 1.280000e+02 : f32
    %139 = vector.broadcast %cst_49 : f32 to vector<8x1xf32>
    %140 = arith.divf %138, %139 : vector<8x1xf32>
    %141 = arith.mulf %134, %134 : vector<8x128xf32>
    %cst_50 = arith.constant dense<0.000000e+00> : vector<8xf32>
    %142 = vector.multi_reduction <add>, %141, %cst_50 [1] : vector<8x128xf32> to vector<8xf32>
    %143 = vector.shape_cast %142 : vector<8xf32> to vector<8x1xf32>
    %cst_51 = arith.constant 1.280000e+02 : f32
    %144 = vector.broadcast %cst_51 : f32 to vector<8x1xf32>
    %145 = arith.divf %143, %144 : vector<8x1xf32>
    %146 = arith.mulf %140, %140 : vector<8x1xf32>
    %147 = arith.subf %145, %146 : vector<8x1xf32>
    %148 = vector.broadcast %140 : vector<8x1xf32> to vector<8x128xf32>
    %149 = arith.subf %134, %148 : vector<8x128xf32>
    %cst_52 = arith.constant 1.000000e-01 : f32
    %150 = vector.broadcast %cst_52 : f32 to vector<8x1xf32>
    %151 = arith.addf %147, %150 : vector<8x1xf32>
    %152 = math.rsqrt %151 : vector<8x1xf32>
    %153 = vector.broadcast %152 : vector<8x1xf32> to vector<8x128xf32>
    %154 = arith.mulf %149, %153 : vector<8x128xf32>
    %155 = vector.broadcast %135 : vector<1x128xf32> to vector<8x128xf32>
    %156 = arith.mulf %154, %155 : vector<8x128xf32>
    %157 = vector.broadcast %136 : vector<1x128xf32> to vector<8x128xf32>
    %158 = arith.addf %156, %157 : vector<8x128xf32>
    %159 = arith.addf %120, %158 : vector<8x128xf32>
    %160 = arith.truncf %158 : vector<8x128xf32> to vector<8x128xbf16>
    %c3_53 = arith.constant 3 : index
    %c0_54 = arith.constant 0 : index
    %c0_55 = arith.constant 0 : index
    %161 = vector.load %arg3[%c3_53, %c0_54, %c0_55] : memref<4x128x128xbf16, #tpu.memory_space<vmem>>, vector<1x128x128xbf16>
    %162 = vector.shape_cast %161 : vector<1x128x128xbf16> to vector<128x128xbf16>
    %cst_56 = arith.constant dense<0.000000e+00> : vector<8x128xf32>
    %163 = tpu.matmul %160, %162, %cst_56 {dimension_numbers = #tpu.dot_dimension_numbers<[1], [0], [0], [1], [0, 0, 1, 1], [], []>} : vector<8x128xbf16>, vector<128x128xbf16>, vector<8x128xf32> -> vector<8x128xf32>
    %c4 = arith.constant 4 : index
    %c0_57 = arith.constant 0 : index
    %164 = vector.load %arg4[%c4, %c0_57] : memref<17x128xf32, #tpu.memory_space<vmem>>, vector<1x128xf32>
    %165 = vector.broadcast %164 : vector<1x128xf32> to vector<8x128xf32>
    %166 = arith.addf %163, %165 : vector<8x128xf32>
    %167 = arith.addf %166, %159 : vector<8x128xf32>
    %168 = arith.negf %167 : vector<8x128xf32>
    %169 = math.exp %168 : vector<8x128xf32>
    %cst_58 = arith.constant 1.000000e+00 : f32
    %170 = vector.broadcast %cst_58 : f32 to vector<8x128xf32>
    %171 = arith.addf %170, %169 : vector<8x128xf32>
    %172 = arith.divf %170, %171 : vector<8x128xf32>
    %173 = arith.mulf %167, %172 : vector<8x128xf32>
    %c9 = arith.constant 9 : index
    %c0_59 = arith.constant 0 : index
    %174 = vector.load %arg4[%c9, %c0_59] : memref<17x128xf32, #tpu.memory_space<vmem>>, vector<1x128xf32>
    %c14 = arith.constant 14 : index
    %c0_60 = arith.constant 0 : index
    %175 = vector.load %arg4[%c14, %c0_60] : memref<17x128xf32, #tpu.memory_space<vmem>>, vector<1x128xf32>
    %cst_61 = arith.constant dense<0.000000e+00> : vector<8xf32>
    %176 = vector.multi_reduction <add>, %173, %cst_61 [1] : vector<8x128xf32> to vector<8xf32>
    %177 = vector.shape_cast %176 : vector<8xf32> to vector<8x1xf32>
    %cst_62 = arith.constant 1.280000e+02 : f32
    %178 = vector.broadcast %cst_62 : f32 to vector<8x1xf32>
    %179 = arith.divf %177, %178 : vector<8x1xf32>
    %180 = arith.mulf %173, %173 : vector<8x128xf32>
    %cst_63 = arith.constant dense<0.000000e+00> : vector<8xf32>
    %181 = vector.multi_reduction <add>, %180, %cst_63 [1] : vector<8x128xf32> to vector<8xf32>
    %182 = vector.shape_cast %181 : vector<8xf32> to vector<8x1xf32>
    %cst_64 = arith.constant 1.280000e+02 : f32
    %183 = vector.broadcast %cst_64 : f32 to vector<8x1xf32>
    %184 = arith.divf %182, %183 : vector<8x1xf32>
    %185 = arith.mulf %179, %179 : vector<8x1xf32>
    %186 = arith.subf %184, %185 : vector<8x1xf32>
    %187 = vector.broadcast %179 : vector<8x1xf32> to vector<8x128xf32>
    %188 = arith.subf %173, %187 : vector<8x128xf32>
    %cst_65 = arith.constant 1.000000e-01 : f32
    %189 = vector.broadcast %cst_65 : f32 to vector<8x1xf32>
    %190 = arith.addf %186, %189 : vector<8x1xf32>
    %191 = math.rsqrt %190 : vector<8x1xf32>
    %192 = vector.broadcast %191 : vector<8x1xf32> to vector<8x128xf32>
    %193 = arith.mulf %188, %192 : vector<8x128xf32>
    %194 = vector.broadcast %174 : vector<1x128xf32> to vector<8x128xf32>
    %195 = arith.mulf %193, %194 : vector<8x128xf32>
    %196 = vector.broadcast %175 : vector<1x128xf32> to vector<8x128xf32>
    %197 = arith.addf %195, %196 : vector<8x128xf32>
    %198 = arith.truncf %197 : vector<8x128xf32> to vector<8x128xbf16>
    %c0_66 = arith.constant 0 : index
    %c0_67 = arith.constant 0 : index
    %199 = vector.load %arg5[%c0_66, %c0_67] : memref<128x256xbf16, #tpu.memory_space<vmem>>, vector<128x256xbf16>
    %cst_68 = arith.constant dense<0.000000e+00> : vector<8x256xf32>
    %200 = tpu.matmul %198, %199, %cst_68 {dimension_numbers = #tpu.dot_dimension_numbers<[1], [0], [0], [1], [0, 0, 1, 1], [], []>} : vector<8x128xbf16>, vector<128x256xbf16>, vector<8x256xf32> -> vector<8x256xf32>
    %201 = vector.extract_strided_slice %200 {offsets = [0, 0], sizes = [8, 128], strides = [1, 1]} : vector<8x256xf32> to vector<8x128xf32>
    %c15 = arith.constant 15 : index
    %c0_69 = arith.constant 0 : index
    %202 = vector.load %arg4[%c15, %c0_69] : memref<17x128xf32, #tpu.memory_space<vmem>>, vector<1x128xf32>
    %203 = vector.broadcast %202 : vector<1x128xf32> to vector<8x128xf32>
    %204 = arith.addf %201, %203 : vector<8x128xf32>
    %c0_70 = arith.constant 0 : index
    %c0_71 = arith.constant 0 : index
    %205 = vector.load %arg6[%c0_70, %c0_71] : memref<8x128xf32, #tpu.memory_space<vmem>>, vector<8x128xf32>
    tpu.vector_store %arg6[%c0_70, %c0_71], %204 {strides = array<i32>} : memref<8x128xf32, #tpu.memory_space<vmem>>, vector<8x128xf32>,
    %206 = vector.extract_strided_slice %200 {offsets = [0, 128], sizes = [8, 128], strides = [1, 1]} : vector<8x256xf32> to vector<8x128xf32>
    %c16 = arith.constant 16 : index
    %c0_72 = arith.constant 0 : index
    %207 = vector.load %arg4[%c16, %c0_72] : memref<17x128xf32, #tpu.memory_space<vmem>>, vector<1x128xf32>
    %208 = vector.broadcast %207 : vector<1x128xf32> to vector<8x128xf32>
    %209 = arith.addf %206, %208 : vector<8x128xf32>
    %c0_73 = arith.constant 0 : index
    %c0_74 = arith.constant 0 : index
    %210 = vector.load %arg7[%c0_73, %c0_74] : memref<8x128xf32, #tpu.memory_space<vmem>>, vector<8x128xf32>
    tpu.vector_store %arg7[%c0_73, %c0_74], %209 {strides = array<i32>} : memref<8x128xf32, #tpu.memory_space<vmem>>, vector<8x128xf32>,
    return
  }
  func.func @transform_0(%arg0: i32) -> (i32, i32) {
    %c0_i32 = arith.constant 0 : i32
    %c0_i32_0 = arith.constant 0 : i32
    return %arg0, %c0_i32 : i32, i32
  }
  func.func @transform_1(%arg0: i32) -> (i32, i32) {
    %c0_i32 = arith.constant 0 : i32
    %c0_i32_0 = arith.constant 0 : i32
    %c0_i32_1 = arith.constant 0 : i32
    return %c0_i32, %c0_i32_0 : i32, i32
  }
  func.func @transform_2(%arg0: i32) -> (i32, i32, i32) {
    %c0_i32 = arith.constant 0 : i32
    %c0_i32_0 = arith.constant 0 : i32
    %c0_i32_1 = arith.constant 0 : i32
    %c0_i32_2 = arith.constant 0 : i32
    return %c0_i32, %c0_i32_0, %c0_i32_1 : i32, i32, i32
  }
  func.func @transform_3(%arg0: i32) -> (i32, i32) {
    %c0_i32 = arith.constant 0 : i32
    %c0_i32_0 = arith.constant 0 : i32
    %c0_i32_1 = arith.constant 0 : i32
    return %c0_i32, %c0_i32_0 : i32, i32
  }
  func.func @transform_4(%arg0: i32) -> (i32, i32) {
    %c0_i32 = arith.constant 0 : i32
    %c0_i32_0 = arith.constant 0 : i32
    %c0_i32_1 = arith.constant 0 : i32
    return %c0_i32, %c0_i32_0 : i32, i32
  }
  func.func @transform_5(%arg0: i32) -> (i32, i32) {
    %c0_i32 = arith.constant 0 : i32
    %c0_i32_0 = arith.constant 0 : i32
    return %arg0, %c0_i32 : i32, i32
  }
  func.func @transform_6(%arg0: i32) -> (i32, i32) {
    %c0_i32 = arith.constant 0 : i32
    %c0_i32_0 = arith.constant 0 : i32
    return %arg0, %c0_i32 : i32, i32
  }
}

</mosaic_0001>

<llo_original>
// kernel: tpu_custom_call.1
$region0: #{tpu_custom_call.1}
  #allocation0 [shape = 'u32[]', space=smem, size = 0x4, offset = 0x4, fixed_abs, tag = 'smem constant byte address 0x4 - core index']
  #allocation1 [shape = 'u32[144,128]{1,0:T(1,128)}', space=vmem, size = 0x12000, scoped, tag = 'internal scratch']
  %s0 = inlined_call_operand.hbm [shape: f32[8,256], index: 0, kind: input, shape index: {}]
  %s1 = inlined_call_operand.hbm [shape: bf16[256,128], index: 1, kind: input, shape index: {}]
  %s2 = inlined_call_operand.hbm [shape: bf16[4,128,128], index: 2, kind: input, shape index: {}]
  %s3 = inlined_call_operand.hbm [shape: f32[17,128], index: 3, kind: input, shape index: {}]
  %s4 = inlined_call_operand.hbm [shape: bf16[128,256], index: 4, kind: input, shape index: {}]
  %s5 = inlined_call_operand.hbm [shape: f32[8,128], index: 5, kind: output, shape index: {0}]
  %s6 = inlined_call_operand.hbm [shape: f32[8,128], index: 6, kind: output, shape index: {1}]
  %7 = xla_tuple %s5, %s6
  %s8 = sld [smem:[#allocation0]]
  $region58: #{tpu_custom_call.1} parent=0
    _
  %s10 = ssub.s32 1, %s8
  %s11 = scalar_select 0, %s10, %s8
  $region1: #{tpu_custom_call.1} parent=0
    #allocation2 [shape = 'u8[8192]{0}', space=vmem, size = 0x2000, scoped, tag = 'input window, operand 0, single buffered']
    #allocation3 [shape = 's32[1]{0}', space=sflag, size = 0x4, scoped, tag = 'scoped memory for tpu_custom_call.1']
    #allocation4 [shape = 's32[1]{0}', space=sflag, size = 0x4, scoped, tag = 'scoped memory for tpu_custom_call.1']
    #allocation5 [shape = 'u8[65536]{0}', space=vmem, size = 0x10000, scoped, tag = 'input window, operand 1, single buffered']
    #allocation6 [shape = 's32[1]{0}', space=sflag, size = 0x4, scoped, tag = 'scoped memory for tpu_custom_call.1']
    #allocation7 [shape = 'u8[131072]{0}', space=vmem, size = 0x20000, scoped, tag = 'input window, operand 2, single buffered']
    #allocation8 [shape = 'u8[12288]{0}', space=vmem, size = 0x3000, scoped, tag = 'input window, operand 3, single buffered']
    #allocation9 [shape = 's32[1]{0}', space=sflag, size = 0x4, scoped, tag = 'scoped memory for tpu_custom_call.1']
    #allocation10 [shape = 'u8[65536]{0}', space=vmem, size = 0x10000, scoped, tag = 'input window, operand 4, single buffered']
    #allocation11 [shape = 'u8[4096]{0}', space=vmem, size = 0x1000, scoped, tag = 'output window, operand 0, single buffered']
    #allocation12 [shape = 'u8[4096]{0}', space=vmem, size = 0x1000, scoped, tag = 'output window, operand 1, single buffered']
    #allocation13 [shape = 's32[1]{0}', space=sflag, size = 0x4, scoped, tag = 'scoped memory for tpu_custom_call.1']
    %12 = vsyncpa [#allocation3], 0
    %13 = vsyncpa [#allocation6], 0
    %14 = vsyncpa [#allocation9], 0
    %15 = vsyncpa [#allocation4], 0
    %16 = vsyncpa [#allocation13], 0
    // Predicated region
    $region2: #{tpu_custom_call.1} parent=1 // pred_check
      _
    $region3: #{tpu_custom_call.1} parent=1 // pred_check_branch
      %18 = sbr.rel (0) target = $region5
    $region4: #{tpu_custom_call.1} parent=1 // pred_region
      %s20 = ssub.s32 256, 256
      %21 = vsyncadd [#allocation3], %s20
      %s23 = sshll.u32 [#allocation2], 4
      %s24 = int_to_ptr.vmem [resolvable:$true] %s23
      %26 = dma.hbm_to_vmem [thread:$0]  %s0, 256, %s24, [#allocation3]
    $region5: #{tpu_custom_call.1} parent=1 // pred_fallthru
      _
    // Predicated region
    $region6: #{tpu_custom_call.1} parent=1 // pred_check
      _
    $region7: #{tpu_custom_call.1} parent=1 // pred_check_branch
      %28 = sbr.rel (0) target = $region9
    $region8: #{tpu_custom_call.1} parent=1 // pred_region
      %s30 = ssub.s32 2048, 2048
      %31 = vsyncadd [#allocation6], %s30
      %s32 = sshll.u32 [#allocation5], 4
      %s33 = int_to_ptr.vmem [resolvable:$true] %s32
      %38 = dma.hbm_to_vmem [thread:$0]  %s1, 2048, %s33, [#allocation6], 64, 64, 4
    $region9: #{tpu_custom_call.1} parent=1 // pred_fallthru
      _
    // Predicated region
    $region10: #{tpu_custom_call.1} parent=1 // pred_check
      _
    $region11: #{tpu_custom_call.1} parent=1 // pred_check_branch
      %40 = sbr.rel (0) target = $region13
    $region12: #{tpu_custom_call.1} parent=1 // pred_region
      %s42 = ssub.s32 4096, 4096
      %43 = vsyncadd [#allocation6], %s42
      %s44 = sshll.u32 [#allocation7], 4
      %s45 = int_to_ptr.vmem [resolvable:$true] %s44
      %50 = dma.hbm_to_vmem [thread:$0]  %s2, 4096, %s45, [#allocation6], 64, 64, 4
    $region13: #{tpu_custom_call.1} parent=1 // pred_fallthru
      _
    // Predicated region
    $region14: #{tpu_custom_call.1} parent=1 // pred_check
      _
    $region15: #{tpu_custom_call.1} parent=1 // pred_check_branch
      %52 = sbr.rel (0) target = $region17
    $region16: #{tpu_custom_call.1} parent=1 // pred_region
      %s54 = ssub.s32 384, 384
      %55 = vsyncadd [#allocation9], %s54
      %s56 = sshll.u32 [#allocation8], 4
      %s57 = int_to_ptr.vmem [resolvable:$true] %s56
      %62 = dma.hbm_to_vmem [thread:$0]  %s3, 384, %s57, [#allocation9], 128, 128, 8
    $region17: #{tpu_custom_call.1} parent=1 // pred_fallthru
      _
    // Predicated region
    $region18: #{tpu_custom_call.1} parent=1 // pred_check
      _
    $region19: #{tpu_custom_call.1} parent=1 // pred_check_branch
      %64 = sbr.rel (0) target = $region21
    $region20: #{tpu_custom_call.1} parent=1 // pred_region
      %s66 = ssub.s32 2048, 2048
      %67 = vsyncadd [#allocation9], %s66
      %s68 = sshll.u32 [#allocation10], 4
      %s69 = int_to_ptr.vmem [resolvable:$true] %s68
      %74 = dma.hbm_to_vmem [thread:$0]  %s4, 2048, %s69, [#allocation9], 128, 128, 8
    $region21: #{tpu_custom_call.1} parent=1 // pred_fallthru
      _
    // Predicated region
    $region22: #{tpu_custom_call.1} parent=1 // pred_check
      _
    $region23: #{tpu_custom_call.1} parent=1 // pred_check_branch
      %76 = sbr.rel (0) target = $region25
    $region24: #{tpu_custom_call.1} parent=1 // pred_region
      %77 = dma.done [#allocation3], 256
    $region25: #{tpu_custom_call.1} parent=1 // pred_fallthru
      _
    // Predicated region
    $region26: #{tpu_custom_call.1} parent=1 // pred_check
      _
    $region27: #{tpu_custom_call.1} parent=1 // pred_check_branch
      %79 = sbr.rel (0) target = $region29
    $region28: #{tpu_custom_call.1} parent=1 // pred_region
      %80 = dma.done [#allocation6], 2048
    $region29: #{tpu_custom_call.1} parent=1 // pred_fallthru
      _
    // Predicated region
    $region30: #{tpu_custom_call.1} parent=1 // pred_check
      _
    $region31: #{tpu_custom_call.1} parent=1 // pred_check_branch
      %82 = sbr.rel (0) target = $region33
    $region32: #{tpu_custom_call.1} parent=1 // pred_region
      %83 = dma.done [#allocation6], 4096
    $region33: #{tpu_custom_call.1} parent=1 // pred_fallthru
      _
    // Predicated region
    $region34: #{tpu_custom_call.1} parent=1 // pred_check
      _
    $region35: #{tpu_custom_call.1} parent=1 // pred_check_branch
      %85 = sbr.rel (0) target = $region37
    $region36: #{tpu_custom_call.1} parent=1 // pred_region
      %86 = dma.done [#allocation9], 384
    $region37: #{tpu_custom_call.1} parent=1 // pred_fallthru
      _
    // Predicated region
    $region38: #{tpu_custom_call.1} parent=1 // pred_check
      _
    $region39: #{tpu_custom_call.1} parent=1 // pred_check_branch
      %88 = sbr.rel (0) target = $region41
    $region40: #{tpu_custom_call.1} parent=1 // pred_region
      %89 = dma.done [#allocation9], 2048
    $region41: #{tpu_custom_call.1} parent=1 // pred_fallthru
      _
    %v91 = vld [vmem:[#allocation2] sm:$0xff]
    %v92 = vld [vmem:[#allocation2 + $0x8] sm:$0xff]
    %v93 = vmul.f32 %v91, %v91
    %v94 = vmul.f32 %v92, %v92
    %v95 = vadd.f32 %v93, %v94
    %96 = vadd.xlane.f32.xlu0 %v95
    %v97 = vpop.xlane.xlu0 %96
    %v98 = vrsqrt.pop %v97
    %v99 = vpack.c.bf16 %v91, %v91
    %v100 = vpack.c.bf16 %v92, %v92
    %v101 = vld [vmem:[#allocation5] sm:$0xf]
    %v102 = vld [vmem:[#allocation5 + $0x4] sm:$0xf]
    %v103 = vld [vmem:[#allocation5 + $0x8] sm:$0xf]
    %v104 = vld [vmem:[#allocation5 + $0xc] sm:$0xf]
    %v105 = vld [vmem:[#allocation5 + $0x10] sm:$0xf]
    %v106 = vld [vmem:[#allocation5 + $0x14] sm:$0xf]
    %v107 = vld [vmem:[#allocation5 + $0x18] sm:$0xf]
    %v108 = vld [vmem:[#allocation5 + $0x1c] sm:$0xf]
    %v109 = vld [vmem:[#allocation5 + $0x20] sm:$0xf]
    %v110 = vld [vmem:[#allocation5 + $0x24] sm:$0xf]
    %v111 = vld [vmem:[#allocation5 + $0x28] sm:$0xf]
    %v112 = vld [vmem:[#allocation5 + $0x2c] sm:$0xf]
    %v113 = vld [vmem:[#allocation5 + $0x30] sm:$0xf]
    %v114 = vld [vmem:[#allocation5 + $0x34] sm:$0xf]
    %v115 = vld [vmem:[#allocation5 + $0x38] sm:$0xf]
    %v116 = vld [vmem:[#allocation5 + $0x3c] sm:$0xf]
    %v117 = vld [vmem:[#allocation5 + $0x40] sm:$0xf]
    %v118 = vld [vmem:[#allocation5 + $0x44] sm:$0xf]
    %v119 = vld [vmem:[#allocation5 + $0x48] sm:$0xf]
    %v120 = vld [vmem:[#allocation5 + $0x4c] sm:$0xf]
    %v121 = vld [vmem:[#allocation5 + $0x50] sm:$0xf]
    %v122 = vld [vmem:[#allocation5 + $0x54] sm:$0xf]
    %v123 = vld [vmem:[#allocation5 + $0x58] sm:$0xf]
    %v124 = vld [vmem:[#allocation5 + $0x5c] sm:$0xf]
    %v125 = vld [vmem:[#allocation5 + $0x60] sm:$0xf]
    %v126 = vld [vmem:[#allocation5 + $0x64] sm:$0xf]
    %v127 = vld [vmem:[#allocation5 + $0x68] sm:$0xf]
    %v128 = vld [vmem:[#allocation5 + $0x6c] sm:$0xf]
    %v129 = vld [vmem:[#allocation5 + $0x70] sm:$0xf]
    %v130 = vld [vmem:[#allocation5 + $0x74] sm:$0xf]
    %v131 = vld [vmem:[#allocation5 + $0x78] sm:$0xf]
    %v132 = vld [vmem:[#allocation5 + $0x7c] sm:$0xf]
    %v165 = vunpack.c.l.b16 %v101
    %v166 = vunpack.c.l.b16 %v102
    %v167 = vunpack.c.l.b16 %v103
    %v168 = vunpack.c.l.b16 %v104
    %v169 = vunpack.c.l.b16 %v105
    %v170 = vunpack.c.l.b16 %v106
    %v171 = vunpack.c.l.b16 %v107
    %v172 = vunpack.c.l.b16 %v108
    %v173 = vunpack.c.l.b16 %v109
    %v174 = vunpack.c.l.b16 %v110
    %v175 = vunpack.c.l.b16 %v111
    %v176 = vunpack.c.l.b16 %v112
    %v177 = vunpack.c.l.b16 %v113
    %v178 = vunpack.c.l.b16 %v114
    %v179 = vunpack.c.l.b16 %v115
    %v180 = vunpack.c.l.b16 %v116
    %v181 = vunpack.c.l.b16 %v117
    %v182 = vunpack.c.l.b16 %v118
    %v183 = vunpack.c.l.b16 %v119
    %v184 = vunpack.c.l.b16 %v120
    %v185 = vunpack.c.l.b16 %v121
    %v186 = vunpack.c.l.b16 %v122
    %v187 = vunpack.c.l.b16 %v123
    %v188 = vunpack.c.l.b16 %v124
    %v189 = vunpack.c.l.b16 %v125
    %v190 = vunpack.c.l.b16 %v126
    %v191 = vunpack.c.l.b16 %v127
    %v192 = vunpack.c.l.b16 %v128
    %v193 = vunpack.c.l.b16 %v129
    %v194 = vunpack.c.l.b16 %v130
    %v195 = vunpack.c.l.b16 %v131
    %v196 = vunpack.c.l.b16 %v132
    %v197 = vpack.c.b16 %v166, %v165
    %v198 = vpack.c.b16 %v168, %v167
    %v199 = vpack.c.b16 %v170, %v169
    %v200 = vpack.c.b16 %v172, %v171
    %v201 = vpack.c.b16 %v174, %v173
    %v202 = vpack.c.b16 %v176, %v175
    %v203 = vpack.c.b16 %v178, %v177
    %v204 = vpack.c.b16 %v180, %v179
    %v205 = vpack.c.b16 %v182, %v181
    %v206 = vpack.c.b16 %v184, %v183
    %v207 = vpack.c.b16 %v186, %v185
    %v208 = vpack.c.b16 %v188, %v187
    %v209 = vpack.c.b16 %v190, %v189
    %v210 = vpack.c.b16 %v192, %v191
    %v211 = vpack.c.b16 %v194, %v193
    %v212 = vpack.c.b16 %v196, %v195
    %229 = vmatprep.subr.bf16.mxu0 0
    %230 = vmatpush1.bf16.msra.mxu0 %v197
    %231 = vmatprep.subr.bf16.mxu0 0
    %232 = vmatpush1.bf16.msra.mxu0 %v198
    %233 = vmatprep.subr.bf16.mxu0 0
    %234 = vmatpush1.bf16.msra.mxu0 %v199
    %235 = vmatprep.subr.bf16.mxu0 0
    %236 = vmatpush1.bf16.msra.mxu0 %v200
    %237 = vmatprep.subr.bf16.mxu0 0
    %238 = vmatpush1.bf16.msra.mxu0 %v201
    %239 = vmatprep.subr.bf16.mxu0 0
    %240 = vmatpush1.bf16.msra.mxu0 %v202
    %241 = vmatprep.subr.bf16.mxu0 0
    %242 = vmatpush1.bf16.msra.mxu0 %v203
    %243 = vmatprep.subr.bf16.mxu0 0
    %244 = vmatpush1.bf16.msra.mxu0 %v204
    %245 = vmatprep.subr.bf16.mxu0 0
    %246 = vmatpush1.bf16.msra.mxu0 %v205
    %247 = vmatprep.subr.bf16.mxu0 0
    %248 = vmatpush1.bf16.msra.mxu0 %v206
    %249 = vmatprep.subr.bf16.mxu0 0
    %250 = vmatpush1.bf16.msra.mxu0 %v207
    %251 = vmatprep.subr.bf16.mxu0 0
    %252 = vmatpush1.bf16.msra.mxu0 %v208
    %253 = vmatprep.subr.bf16.mxu0 0
    %254 = vmatpush1.bf16.msra.mxu0 %v209
    %255 = vmatprep.subr.bf16.mxu0 0
    %256 = vmatpush1.bf16.msra.mxu0 %v210
    %257 = vmatprep.subr.bf16.mxu0 0
    %258 = vmatpush1.bf16.msra.mxu0 %v211
    %259 = vmatprep.subr.bf16.mxu0 0
    %260 = vmatpush1.bf16.msra.mxu0 %v212
    %261 = vmatprep.mubr.bf16.mxu0 %v100
    %262 = vmatmul.mubr.bf16.gmra.mrb[0].mxu0 %v99
    %v263 = vpop.f32.mrb[0].mxu0
    %v264 = vadd.f32 0.0, %v263
    %v265 = vpop.f32.mrb[0].mxu0
    %v266 = vpop.f32.mrb[0].mxu0
    %v267 = vpop.f32.mrb[0].mxu0
    %268 = vdwg.mxu0
    %v269 = vmul.f32 %v264, %v98
    %v270 = vld [vmem:[#allocation8] sm:$0x1]
    %v271 = vlaneseq
    %v272 = vshrl.u32 %v271, 7
    %v273 = vsub.s32 0, %v272
    %v274 = vrot.slane %v270, %v273
    %v275 = vadd.f32 %v269, %v274
    %v276 = vxor.u32 %v275, 2147483648
    %v277 = vmul.f32 %v276, 1.442695
    %v278 = vpow.pop %v277
    %v279 = vadd.f32 %v278, 1.0
    %v280 = vrcp.pop %v279
    %v281 = vmul.f32 1.0, %v280
    %v282 = vmul.f32 %v275, %v281
    %v283 = vld [vmem:[#allocation8 + $0x5] sm:$0x1]
    %v284 = vld [vmem:[#allocation8 + $0xa] sm:$0x1]
    %285 = vadd.xlane.f32.xlu0 %v282
    %v286 = vpop.xlane.xlu0 %285
    %v287 = vrcp.pop 128.0
    %v288 = vmul.f32 %v286, %v287
    %v289 = vmul.f32 %v282, %v282
    %290 = vadd.xlane.f32.xlu0 %v289
    %v291 = vpop.xlane.xlu0 %290
    %v292 = vmul.f32 %v291, %v287
    %v293 = vmul.f32 %v288, %v288
    %v294 = vsub.f32 %v292, %v293
    %v295 = vsub.f32 %v282, %v288
    %v296 = vadd.f32 %v294, 0.1
    %v297 = vrsqrt.pop %v296
    %v298 = vmul.f32 %v295, %v297
    %v299 = vlaneseq
    %v300 = vshrl.u32 %v299, 7
    %v301 = vsub.s32 0, %v300
    %v302 = vrot.slane %v283, %v301
    %v303 = vmul.f32 %v298, %v302
    %v304 = vlaneseq
    %v305 = vshrl.u32 %v304, 7
    %v306 = vsub.s32 0, %v305
    %v307 = vrot.slane %v284, %v306
    %v308 = vadd.f32 %v303, %v307
    %v309 = vpack.c.bf16 %v308, %v308
    %v310 = vld [vmem:[#allocation7] sm:$0xf]
    %v311 = vld [vmem:[#allocation7 + $0x4] sm:$0xf]
    %v312 = vld [vmem:[#allocation7 + $0x8] sm:$0xf]
    %v313 = vld [vmem:[#allocation7 + $0xc] sm:$0xf]
    %v314 = vld [vmem:[#allocation7 + $0x10] sm:$0xf]
    %v315 = vld [vmem:[#allocation7 + $0x14] sm:$0xf]
    %v316 = vld [vmem:[#allocation7 + $0x18] sm:$0xf]
    %v317 = vld [vmem:[#allocation7 + $0x1c] sm:$0xf]
    %v318 = vld [vmem:[#allocation7 + $0x20] sm:$0xf]
    %v319 = vld [vmem:[#allocation7 + $0x24] sm:$0xf]
    %v320 = vld [vmem:[#allocation7 + $0x28] sm:$0xf]
    %v321 = vld [vmem:[#allocation7 + $0x2c] sm:$0xf]
    %v322 = vld [vmem:[#allocation7 + $0x30] sm:$0xf]
    %v323 = vld [vmem:[#allocation7 + $0x34] sm:$0xf]
    %v324 = vld [vmem:[#allocation7 + $0x38] sm:$0xf]
    %v325 = vld [vmem:[#allocation7 + $0x3c] sm:$0xf]
    %v326 = vld [vmem:[#allocation8 + $0x1] sm:$0x1]
    %v327 = vlaneseq
    %v328 = vshrl.u32 %v327, 7
    %v329 = vsub.s32 0, %v328
    %v330 = vrot.slane %v326, %v329
    %v347 = vunpack.c.l.b16 %v310
    %v348 = vunpack.c.l.b16 %v311
    %v349 = vunpack.c.l.b16 %v312
    %v350 = vunpack.c.l.b16 %v313
    %v351 = vunpack.c.l.b16 %v314
    %v352 = vunpack.c.l.b16 %v315
    %v353 = vunpack.c.l.b16 %v316
    %v354 = vunpack.c.l.b16 %v317
    %v355 = vunpack.c.l.b16 %v318
    %v356 = vunpack.c.l.b16 %v319
    %v357 = vunpack.c.l.b16 %v320
    %v358 = vunpack.c.l.b16 %v321
    %v359 = vunpack.c.l.b16 %v322
    %v360 = vunpack.c.l.b16 %v323
    %v361 = vunpack.c.l.b16 %v324
    %v362 = vunpack.c.l.b16 %v325
    %v363 = vpack.c.b16 %v348, %v347
    %v364 = vpack.c.b16 %v350, %v349
    %v365 = vpack.c.b16 %v352, %v351
    %v366 = vpack.c.b16 %v354, %v353
    %v367 = vpack.c.b16 %v356, %v355
    %v368 = vpack.c.b16 %v358, %v357
    %v369 = vpack.c.b16 %v360, %v359
    %v370 = vpack.c.b16 %v362, %v361
    %379 = vmatprep.subr.bf16.mxu0 0
    %380 = vmatpush1.bf16.msra.mxu0 %v363
    %381 = vmatprep.subr.bf16.mxu0 0
    %382 = vmatpush1.bf16.msra.mxu0 %v364
    %383 = vmatprep.subr.bf16.mxu0 0
    %384 = vmatpush1.bf16.msra.mxu0 %v365
    %385 = vmatprep.subr.bf16.mxu0 0
    %386 = vmatpush1.bf16.msra.mxu0 %v366
    %387 = vmatprep.subr.bf16.mxu0 0
    %388 = vmatpush1.bf16.msra.mxu0 %v367
    %389 = vmatprep.subr.bf16.mxu0 0
    %390 = vmatpush1.bf16.msra.mxu0 %v368
    %391 = vmatprep.subr.bf16.mxu0 0
    %392 = vmatpush1.bf16.msra.mxu0 %v369
    %393 = vmatprep.subr.bf16.mxu0 0
    %394 = vmatpush1.bf16.msra.mxu0 %v370
    %395 = vmatprep.subr.bf16.mxu0 0
    %396 = vmatpush1.bf16.msra.mxu0 0
    %397 = vmatprep.subr.bf16.mxu0 0
    %398 = vmatpush1.bf16.msra.mxu0 0
    %399 = vmatprep.subr.bf16.mxu0 0
    %400 = vmatpush1.bf16.msra.mxu0 0
    %401 = vmatprep.subr.bf16.mxu0 0
    %402 = vmatpush1.bf16.msra.mxu0 0
    %403 = vmatprep.subr.bf16.mxu0 0
    %404 = vmatpush1.bf16.msra.mxu0 0
    %405 = vmatprep.subr.bf16.mxu0 0
    %406 = vmatpush1.bf16.msra.mxu0 0
    %407 = vmatprep.subr.bf16.mxu0 0
    %408 = vmatpush1.bf16.msra.mxu0 0
    %409 = vmatprep.subr.bf16.mxu0 0
    %410 = vmatpush1.bf16.msra.mxu0 0
    %411 = vmatprep.mubr.bf16.mxu0 0
    %412 = vmatmul.mubr.bf16.gmra.mrb[0].mxu0 %v309
    %v413 = vpop.f32.mrb[0].mxu0
    %v414 = vadd.f32 %v330, %v413
    %v415 = vpop.f32.mrb[0].mxu0
    %v416 = vpop.f32.mrb[0].mxu0
    %v417 = vpop.f32.mrb[0].mxu0
    %418 = vdwg.mxu0
    %v419 = vadd.f32 %v414, %v308
    %v420 = vxor.u32 %v419, 2147483648
    %v421 = vmul.f32 %v420, 1.442695
    %v422 = vpow.pop %v421
    %v423 = vadd.f32 %v422, 1.0
    %v424 = vrcp.pop %v423
    %v425 = vmul.f32 1.0, %v424
    %v426 = vmul.f32 %v419, %v425
    %v427 = vld [vmem:[#allocation8 + $0x6] sm:$0x1]
    %v428 = vld [vmem:[#allocation8 + $0xb] sm:$0x1]
    %429 = vadd.xlane.f32.xlu0 %v426
    %v430 = vpop.xlane.xlu0 %429
    %v431 = vmul.f32 %v430, %v287
    %v432 = vmul.f32 %v426, %v426
    %433 = vadd.xlane.f32.xlu0 %v432
    %v434 = vpop.xlane.xlu0 %433
    %v435 = vmul.f32 %v434, %v287
    %v436 = vmul.f32 %v431, %v431
    %v437 = vsub.f32 %v435, %v436
    %v438 = vsub.f32 %v426, %v431
    %v439 = vadd.f32 %v437, 0.1
    %v440 = vrsqrt.pop %v439
    %v441 = vmul.f32 %v438, %v440
    %v442 = vlaneseq
    %v443 = vshrl.u32 %v442, 7
    %v444 = vsub.s32 0, %v443
    %v445 = vrot.slane %v427, %v444
    %v446 = vmul.f32 %v441, %v445
    %v447 = vlaneseq
    %v448 = vshrl.u32 %v447, 7
    %v449 = vsub.s32 0, %v448
    %v450 = vrot.slane %v428, %v449
    %v451 = vadd.f32 %v446, %v450
    %v452 = vadd.f32 %v308, %v451
    %v453 = vpack.c.bf16 %v451, %v451
    %s454 = scalar_lea.vmem [#allocation7], 64
    %v455 = vld [vmem:[%s454] sm:$0xf]
    %v456 = vld [vmem:[%s454 + $0x4] sm:$0xf]
    %v457 = vld [vmem:[%s454 + $0x8] sm:$0xf]
    %v458 = vld [vmem:[%s454 + $0xc] sm:$0xf]
    %v459 = vld [vmem:[%s454 + $0x10] sm:$0xf]
    %v460 = vld [vmem:[%s454 + $0x14] sm:$0xf]
    %v461 = vld [vmem:[%s454 + $0x18] sm:$0xf]
    %v462 = vld [vmem:[%s454 + $0x1c] sm:$0xf]
    %v463 = vld [vmem:[%s454 + $0x20] sm:$0xf]
    %v464 = vld [vmem:[%s454 + $0x24] sm:$0xf]
    %v465 = vld [vmem:[%s454 + $0x28] sm:$0xf]
    %v466 = vld [vmem:[%s454 + $0x2c] sm:$0xf]
    %v467 = vld [vmem:[%s454 + $0x30] sm:$0xf]
    %v468 = vld [vmem:[%s454 + $0x34] sm:$0xf]
    %v469 = vld [vmem:[%s454 + $0x38] sm:$0xf]
    %v470 = vld [vmem:[%s454 + $0x3c] sm:$0xf]
    %v471 = vld [vmem:[#allocation8 + $0x2] sm:$0x1]
    %v472 = vlaneseq
    %v473 = vshrl.u32 %v472, 7
    %v474 = vsub.s32 0, %v473
    %v475 = vrot.slane %v471, %v474
    %v492 = vunpack.c.l.b16 %v455
    %v493 = vunpack.c.l.b16 %v456
    %v494 = vunpack.c.l.b16 %v457
    %v495 = vunpack.c.l.b16 %v458
    %v496 = vunpack.c.l.b16 %v459
    %v497 = vunpack.c.l.b16 %v460
    %v498 = vunpack.c.l.b16 %v461
    %v499 = vunpack.c.l.b16 %v462
    %v500 = vunpack.c.l.b16 %v463
    %v501 = vunpack.c.l.b16 %v464
    %v502 = vunpack.c.l.b16 %v465
    %v503 = vunpack.c.l.b16 %v466
    %v504 = vunpack.c.l.b16 %v467
    %v505 = vunpack.c.l.b16 %v468
    %v506 = vunpack.c.l.b16 %v469
    %v507 = vunpack.c.l.b16 %v470
    %v508 = vpack.c.b16 %v493, %v492
    %v509 = vpack.c.b16 %v495, %v494
    %v510 = vpack.c.b16 %v497, %v496
    %v511 = vpack.c.b16 %v499, %v498
    %v512 = vpack.c.b16 %v501, %v500
    %v513 = vpack.c.b16 %v503, %v502
    %v514 = vpack.c.b16 %v505, %v504
    %v515 = vpack.c.b16 %v507, %v506
    %524 = vmatprep.subr.bf16.mxu0 0
    %525 = vmatpush1.bf16.msra.mxu0 %v508
    %526 = vmatprep.subr.bf16.mxu0 0
    %527 = vmatpush1.bf16.msra.mxu0 %v509
    %528 = vmatprep.subr.bf16.mxu0 0
    %529 = vmatpush1.bf16.msra.mxu0 %v510
    %530 = vmatprep.subr.bf16.mxu0 0
    %531 = vmatpush1.bf16.msra.mxu0 %v511
    %532 = vmatprep.subr.bf16.mxu0 0
    %533 = vmatpush1.bf16.msra.mxu0 %v512
    %534 = vmatprep.subr.bf16.mxu0 0
    %535 = vmatpush1.bf16.msra.mxu0 %v513
    %536 = vmatprep.subr.bf16.mxu0 0
    %537 = vmatpush1.bf16.msra.mxu0 %v514
    %538 = vmatprep.subr.bf16.mxu0 0
    %539 = vmatpush1.bf16.msra.mxu0 %v515
    %540 = vmatprep.subr.bf16.mxu0 0
    %541 = vmatpush1.bf16.msra.mxu0 0
    %542 = vmatprep.subr.bf16.mxu0 0
    %543 = vmatpush1.bf16.msra.mxu0 0
    %544 = vmatprep.subr.bf16.mxu0 0
    %545 = vmatpush1.bf16.msra.mxu0 0
    %546 = vmatprep.subr.bf16.mxu0 0
    %547 = vmatpush1.bf16.msra.mxu0 0
    %548 = vmatprep.subr.bf16.mxu0 0
    %549 = vmatpush1.bf16.msra.mxu0 0
    %550 = vmatprep.subr.bf16.mxu0 0
    %551 = vmatpush1.bf16.msra.mxu0 0
    %552 = vmatprep.subr.bf16.mxu0 0
    %553 = vmatpush1.bf16.msra.mxu0 0
    %554 = vmatprep.subr.bf16.mxu0 0
    %555 = vmatpush1.bf16.msra.mxu0 0
    %556 = vmatprep.mubr.bf16.mxu0 0
    %557 = vmatmul.mubr.bf16.gmra.mrb[0].mxu0 %v453
    %v558 = vpop.f32.mrb[0].mxu0
    %v559 = vadd.f32 %v475, %v558
    %v560 = vpop.f32.mrb[0].mxu0
    %v561 = vpop.f32.mrb[0].mxu0
    %v562 = vpop.f32.mrb[0].mxu0
    %563 = vdwg.mxu0
    %v564 = vadd.f32 %v559, %v452
    %v565 = vxor.u32 %v564, 2147483648
    %v566 = vmul.f32 %v565, 1.442695
    %v567 = vpow.pop %v566
    %v568 = vadd.f32 %v567, 1.0
    %v569 = vrcp.pop %v568
    %v570 = vmul.f32 1.0, %v569
    %v571 = vmul.f32 %v564, %v570
    %v572 = vld [vmem:[#allocation8 + $0x7] sm:$0x1]
    %v573 = vld [vmem:[#allocation8 + $0xc] sm:$0x1]
    %574 = vadd.xlane.f32.xlu0 %v571
    %v575 = vpop.xlane.xlu0 %574
    %v576 = vmul.f32 %v575, %v287
    %v577 = vmul.f32 %v571, %v571
    %578 = vadd.xlane.f32.xlu0 %v577
    %v579 = vpop.xlane.xlu0 %578
    %v580 = vmul.f32 %v579, %v287
    %v581 = vmul.f32 %v576, %v576
    %v582 = vsub.f32 %v580, %v581
    %v583 = vsub.f32 %v571, %v576
    %v584 = vadd.f32 %v582, 0.1
    %v585 = vrsqrt.pop %v584
    %v586 = vmul.f32 %v583, %v585
    %v587 = vlaneseq
    %v588 = vshrl.u32 %v587, 7
    %v589 = vsub.s32 0, %v588
    %v590 = vrot.slane %v572, %v589
    %v591 = vmul.f32 %v586, %v590
    %v592 = vlaneseq
    %v593 = vshrl.u32 %v592, 7
    %v594 = vsub.s32 0, %v593
    %v595 = vrot.slane %v573, %v594
    %v596 = vadd.f32 %v591, %v595
    %v597 = vadd.f32 %v452, %v596
    %v598 = vpack.c.bf16 %v596, %v596
    %s599 = scalar_lea.vmem [#allocation7], 128
    %v600 = vld [vmem:[%s599] sm:$0xf]
    %v601 = vld [vmem:[%s599 + $0x4] sm:$0xf]
    %v602 = vld [vmem:[%s599 + $0x8] sm:$0xf]
    %v603 = vld [vmem:[%s599 + $0xc] sm:$0xf]
    %v604 = vld [vmem:[%s599 + $0x10] sm:$0xf]
    %v605 = vld [vmem:[%s599 + $0x14] sm:$0xf]
    %v606 = vld [vmem:[%s599 + $0x18] sm:$0xf]
    %v607 = vld [vmem:[%s599 + $0x1c] sm:$0xf]
    %v608 = vld [vmem:[%s599 + $0x20] sm:$0xf]
    %v609 = vld [vmem:[%s599 + $0x24] sm:$0xf]
    %v610 = vld [vmem:[%s599 + $0x28] sm:$0xf]
    %v611 = vld [vmem:[%s599 + $0x2c] sm:$0xf]
    %v612 = vld [vmem:[%s599 + $0x30] sm:$0xf]
    %v613 = vld [vmem:[%s599 + $0x34] sm:$0xf]
    %v614 = vld [vmem:[%s599 + $0x38] sm:$0xf]
    %v615 = vld [vmem:[%s599 + $0x3c] sm:$0xf]
    %v616 = vld [vmem:[#allocation8 + $0x3] sm:$0x1]
    %v617 = vlaneseq
    %v618 = vshrl.u32 %v617, 7
    %v619 = vsub.s32 0, %v618
    %v620 = vrot.slane %v616, %v619
    %v637 = vunpack.c.l.b16 %v600
    %v638 = vunpack.c.l.b16 %v601
    %v639 = vunpack.c.l.b16 %v602
    %v640 = vunpack.c.l.b16 %v603
    %v641 = vunpack.c.l.b16 %v604
    %v642 = vunpack.c.l.b16 %v605
    %v643 = vunpack.c.l.b16 %v606
    %v644 = vunpack.c.l.b16 %v607
    %v645 = vunpack.c.l.b16 %v608
    %v646 = vunpack.c.l.b16 %v609
    %v647 = vunpack.c.l.b16 %v610
    %v648 = vunpack.c.l.b16 %v611
    %v649 = vunpack.c.l.b16 %v612
    %v650 = vunpack.c.l.b16 %v613
    %v651 = vunpack.c.l.b16 %v614
    %v652 = vunpack.c.l.b16 %v615
    %v653 = vpack.c.b16 %v638, %v637
    %v654 = vpack.c.b16 %v640, %v639
    %v655 = vpack.c.b16 %v642, %v641
    %v656 = vpack.c.b16 %v644, %v643
    %v657 = vpack.c.b16 %v646, %v645
    %v658 = vpack.c.b16 %v648, %v647
    %v659 = vpack.c.b16 %v650, %v649
    %v660 = vpack.c.b16 %v652, %v651
    %669 = vmatprep.subr.bf16.mxu0 0
    %670 = vmatpush1.bf16.msra.mxu0 %v653
    %671 = vmatprep.subr.bf16.mxu0 0
    %672 = vmatpush1.bf16.msra.mxu0 %v654
    %673 = vmatprep.subr.bf16.mxu0 0
    %674 = vmatpush1.bf16.msra.mxu0 %v655
    %675 = vmatprep.subr.bf16.mxu0 0
    %676 = vmatpush1.bf16.msra.mxu0 %v656
    %677 = vmatprep.subr.bf16.mxu0 0
    %678 = vmatpush1.bf16.msra.mxu0 %v657
    %679 = vmatprep.subr.bf16.mxu0 0
    %680 = vmatpush1.bf16.msra.mxu0 %v658
    %681 = vmatprep.subr.bf16.mxu0 0
    %682 = vmatpush1.bf16.msra.mxu0 %v659
    %683 = vmatprep.subr.bf16.mxu0 0
    %684 = vmatpush1.bf16.msra.mxu0 %v660
    %685 = vmatprep.subr.bf16.mxu0 0
    %686 = vmatpush1.bf16.msra.mxu0 0
    %687 = vmatprep.subr.bf16.mxu0 0
    %688 = vmatpush1.bf16.msra.mxu0 0
    %689 = vmatprep.subr.bf16.mxu0 0
    %690 = vmatpush1.bf16.msra.mxu0 0
    %691 = vmatprep.subr.bf16.mxu0 0
    %692 = vmatpush1.bf16.msra.mxu0 0
    %693 = vmatprep.subr.bf16.mxu0 0
    %694 = vmatpush1.bf16.msra.mxu0 0
    %695 = vmatprep.subr.bf16.mxu0 0
    %696 = vmatpush1.bf16.msra.mxu0 0
    %697 = vmatprep.subr.bf16.mxu0 0
    %698 = vmatpush1.bf16.msra.mxu0 0
    %699 = vmatprep.subr.bf16.mxu0 0
    %700 = vmatpush1.bf16.msra.mxu0 0
    %701 = vmatprep.mubr.bf16.mxu0 0
    %702 = vmatmul.mubr.bf16.gmra.mrb[0].mxu0 %v598
    %v703 = vpop.f32.mrb[0].mxu0
    %v704 = vadd.f32 %v620, %v703
    %v705 = vpop.f32.mrb[0].mxu0
    %v706 = vpop.f32.mrb[0].mxu0
    %v707 = vpop.f32.mrb[0].mxu0
    %708 = vdwg.mxu0
    %v709 = vadd.f32 %v704, %v597
    %v710 = vxor.u32 %v709, 2147483648
    %v711 = vmul.f32 %v710, 1.442695
    %v712 = vpow.pop %v711
    %v713 = vadd.f32 %v712, 1.0
    %v714 = vrcp.pop %v713
    %v715 = vmul.f32 1.0, %v714
    %v716 = vmul.f32 %v709, %v715
    %v717 = vld [vmem:[#allocation8 + $0x8] sm:$0x1]
    %v718 = vld [vmem:[#allocation8 + $0xd] sm:$0x1]
    %719 = vadd.xlane.f32.xlu0 %v716
    %v720 = vpop.xlane.xlu0 %719
    %v721 = vmul.f32 %v720, %v287
    %v722 = vmul.f32 %v716, %v716
    %723 = vadd.xlane.f32.xlu0 %v722
    %v724 = vpop.xlane.xlu0 %723
    %v725 = vmul.f32 %v724, %v287
    %v726 = vmul.f32 %v721, %v721
    %v727 = vsub.f32 %v725, %v726
    %v728 = vsub.f32 %v716, %v721
    %v729 = vadd.f32 %v727, 0.1
    %v730 = vrsqrt.pop %v729
    %v731 = vmul.f32 %v728, %v730
    %v732 = vlaneseq
    %v733 = vshrl.u32 %v732, 7
    %v734 = vsub.s32 0, %v733
    %v735 = vrot.slane %v717, %v734
    %v736 = vmul.f32 %v731, %v735
    %v737 = vlaneseq
    %v738 = vshrl.u32 %v737, 7
    %v739 = vsub.s32 0, %v738
    %v740 = vrot.slane %v718, %v739
    %v741 = vadd.f32 %v736, %v740
    %v742 = vadd.f32 %v597, %v741
    %v743 = vpack.c.bf16 %v741, %v741
    %s744 = scalar_lea.vmem [#allocation7], 192
    %v745 = vld [vmem:[%s744] sm:$0xf]
    %v746 = vld [vmem:[%s744 + $0x4] sm:$0xf]
    %v747 = vld [vmem:[%s744 + $0x8] sm:$0xf]
    %v748 = vld [vmem:[%s744 + $0xc] sm:$0xf]
    %v749 = vld [vmem:[%s744 + $0x10] sm:$0xf]
    %v750 = vld [vmem:[%s744 + $0x14] sm:$0xf]
    %v751 = vld [vmem:[%s744 + $0x18] sm:$0xf]
    %v752 = vld [vmem:[%s744 + $0x1c] sm:$0xf]
    %v753 = vld [vmem:[%s744 + $0x20] sm:$0xf]
    %v754 = vld [vmem:[%s744 + $0x24] sm:$0xf]
    %v755 = vld [vmem:[%s744 + $0x28] sm:$0xf]
    %v756 = vld [vmem:[%s744 + $0x2c] sm:$0xf]
    %v757 = vld [vmem:[%s744 + $0x30] sm:$0xf]
    %v758 = vld [vmem:[%s744 + $0x34] sm:$0xf]
    %v759 = vld [vmem:[%s744 + $0x38] sm:$0xf]
    %v760 = vld [vmem:[%s744 + $0x3c] sm:$0xf]
    %v761 = vld [vmem:[#allocation8 + $0x4] sm:$0x1]
    %v762 = vlaneseq
    %v763 = vshrl.u32 %v762, 7
    %v764 = vsub.s32 0, %v763
    %v765 = vrot.slane %v761, %v764
    %v782 = vunpack.c.l.b16 %v745
    %v783 = vunpack.c.l.b16 %v746
    %v784 = vunpack.c.l.b16 %v747
    %v785 = vunpack.c.l.b16 %v748
    %v786 = vunpack.c.l.b16 %v749
    %v787 = vunpack.c.l.b16 %v750
    %v788 = vunpack.c.l.b16 %v751
    %v789 = vunpack.c.l.b16 %v752
    %v790 = vunpack.c.l.b16 %v753
    %v791 = vunpack.c.l.b16 %v754
    %v792 = vunpack.c.l.b16 %v755
    %v793 = vunpack.c.l.b16 %v756
    %v794 = vunpack.c.l.b16 %v757
    %v795 = vunpack.c.l.b16 %v758
    %v796 = vunpack.c.l.b16 %v759
    %v797 = vunpack.c.l.b16 %v760
    %v798 = vpack.c.b16 %v783, %v782
    %v799 = vpack.c.b16 %v785, %v784
    %v800 = vpack.c.b16 %v787, %v786
    %v801 = vpack.c.b16 %v789, %v788
    %v802 = vpack.c.b16 %v791, %v790
    %v803 = vpack.c.b16 %v793, %v792
    %v804 = vpack.c.b16 %v795, %v794
    %v805 = vpack.c.b16 %v797, %v796
    %814 = vmatprep.subr.bf16.mxu0 0
    %815 = vmatpush1.bf16.msra.mxu0 %v798
    %816 = vmatprep.subr.bf16.mxu0 0
    %817 = vmatpush1.bf16.msra.mxu0 %v799
    %818 = vmatprep.subr.bf16.mxu0 0
    %819 = vmatpush1.bf16.msra.mxu0 %v800
    %820 = vmatprep.subr.bf16.mxu0 0
    %821 = vmatpush1.bf16.msra.mxu0 %v801
    %822 = vmatprep.subr.bf16.mxu0 0
    %823 = vmatpush1.bf16.msra.mxu0 %v802
    %824 = vmatprep.subr.bf16.mxu0 0
    %825 = vmatpush1.bf16.msra.mxu0 %v803
    %826 = vmatprep.subr.bf16.mxu0 0
    %827 = vmatpush1.bf16.msra.mxu0 %v804
    %828 = vmatprep.subr.bf16.mxu0 0
    %829 = vmatpush1.bf16.msra.mxu0 %v805
    %830 = vmatprep.subr.bf16.mxu0 0
    %831 = vmatpush1.bf16.msra.mxu0 0
    %832 = vmatprep.subr.bf16.mxu0 0
    %833 = vmatpush1.bf16.msra.mxu0 0
    %834 = vmatprep.subr.bf16.mxu0 0
    %835 = vmatpush1.bf16.msra.mxu0 0
    %836 = vmatprep.subr.bf16.mxu0 0
    %837 = vmatpush1.bf16.msra.mxu0 0
    %838 = vmatprep.subr.bf16.mxu0 0
    %839 = vmatpush1.bf16.msra.mxu0 0
    %840 = vmatprep.subr.bf16.mxu0 0
    %841 = vmatpush1.bf16.msra.mxu0 0
    %842 = vmatprep.subr.bf16.mxu0 0
    %843 = vmatpush1.bf16.msra.mxu0 0
    %844 = vmatprep.subr.bf16.mxu0 0
    %845 = vmatpush1.bf16.msra.mxu0 0
    %846 = vmatprep.mubr.bf16.mxu0 0
    %847 = vmatmul.mubr.bf16.gmra.mrb[0].mxu0 %v743
    %v848 = vpop.f32.mrb[0].mxu0
    %v849 = vadd.f32 %v765, %v848
    %v850 = vpop.f32.mrb[0].mxu0
    %v851 = vpop.f32.mrb[0].mxu0
    %v852 = vpop.f32.mrb[0].mxu0
    %853 = vdwg.mxu0
    %v854 = vadd.f32 %v849, %v742
    %v855 = vxor.u32 %v854, 2147483648
    %v856 = vmul.f32 %v855, 1.442695
    %v857 = vpow.pop %v856
    %v858 = vadd.f32 %v857, 1.0
    %v859 = vrcp.pop %v858
    %v860 = vmul.f32 1.0, %v859
    %v861 = vmul.f32 %v854, %v860
    %v862 = vld [vmem:[#allocation8 + $0x9] sm:$0x1]
    %v863 = vld [vmem:[#allocation8 + $0xe] sm:$0x1]
    %864 = vadd.xlane.f32.xlu0 %v861
    %v865 = vpop.xlane.xlu0 %864
    %v866 = vmul.f32 %v865, %v287
    %v867 = vmul.f32 %v861, %v861
    %868 = vadd.xlane.f32.xlu0 %v867
    %v869 = vpop.xlane.xlu0 %868
    %v870 = vmul.f32 %v869, %v287
    %v871 = vmul.f32 %v866, %v866
    %v872 = vsub.f32 %v870, %v871
    %v873 = vsub.f32 %v861, %v866
    %v874 = vadd.f32 %v872, 0.1
    %v875 = vrsqrt.pop %v874
    %v876 = vmul.f32 %v873, %v875
    %v877 = vlaneseq
    %v878 = vshrl.u32 %v877, 7
    %v879 = vsub.s32 0, %v878
    %v880 = vrot.slane %v862, %v879
    %v881 = vmul.f32 %v876, %v880
    %v882 = vlaneseq
    %v883 = vshrl.u32 %v882, 7
    %v884 = vsub.s32 0, %v883
    %v885 = vrot.slane %v863, %v884
    %v886 = vadd.f32 %v881, %v885
    %v887 = vpack.c.bf16 %v886, %v886
    %v888 = vld [vmem:[#allocation10] sm:$0xff]
    %v889 = vld [vmem:[#allocation10 + $0x8] sm:$0xff]
    %v890 = vld [vmem:[#allocation10 + $0x10] sm:$0xff]
    %v891 = vld [vmem:[#allocation10 + $0x18] sm:$0xff]
    %v892 = vld [vmem:[#allocation10 + $0x20] sm:$0xff]
    %v893 = vld [vmem:[#allocation10 + $0x28] sm:$0xff]
    %v894 = vld [vmem:[#allocation10 + $0x30] sm:$0xff]
    %v895 = vld [vmem:[#allocation10 + $0x38] sm:$0xff]
    %v896 = vld [vmem:[#allocation10 + $0x40] sm:$0xff]
    %v897 = vld [vmem:[#allocation10 + $0x48] sm:$0xff]
    %v898 = vld [vmem:[#allocation10 + $0x50] sm:$0xff]
    %v899 = vld [vmem:[#allocation10 + $0x58] sm:$0xff]
    %v900 = vld [vmem:[#allocation10 + $0x60] sm:$0xff]
    %v901 = vld [vmem:[#allocation10 + $0x68] sm:$0xff]
    %v902 = vld [vmem:[#allocation10 + $0x70] sm:$0xff]
    %v903 = vld [vmem:[#allocation10 + $0x78] sm:$0xff]
    %v920 = vunpack.c.l.b16 %v888
    %v921 = vunpack.c.h.b16 %v888
    %v922 = vunpack.c.l.b16 %v889
    %v923 = vunpack.c.h.b16 %v889
    %v924 = vunpack.c.l.b16 %v890
    %v925 = vunpack.c.h.b16 %v890
    %v926 = vunpack.c.l.b16 %v891
    %v927 = vunpack.c.h.b16 %v891
    %v928 = vunpack.c.l.b16 %v892
    %v929 = vunpack.c.h.b16 %v892
    %v930 = vunpack.c.l.b16 %v893
    %v931 = vunpack.c.h.b16 %v893
    %v932 = vunpack.c.l.b16 %v894
    %v933 = vunpack.c.h.b16 %v894
    %v934 = vunpack.c.l.b16 %v895
    %v935 = vunpack.c.h.b16 %v895
    %v936 = vunpack.c.l.b16 %v896
    %v937 = vunpack.c.h.b16 %v896
    %v938 = vunpack.c.l.b16 %v897
    %v939 = vunpack.c.h.b16 %v897
    %v940 = vunpack.c.l.b16 %v898
    %v941 = vunpack.c.h.b16 %v898
    %v942 = vunpack.c.l.b16 %v899
    %v943 = vunpack.c.h.b16 %v899
    %v944 = vunpack.c.l.b16 %v900
    %v945 = vunpack.c.h.b16 %v900
    %v946 = vunpack.c.l.b16 %v901
    %v947 = vunpack.c.h.b16 %v901
    %v948 = vunpack.c.l.b16 %v902
    %v949 = vunpack.c.h.b16 %v902
    %v950 = vunpack.c.l.b16 %v903
    %v951 = vunpack.c.h.b16 %v903
    %v952 = vpack.c.b16 %v922, %v920
    %v953 = vpack.c.b16 %v923, %v921
    %v954 = vpack.c.b16 %v926, %v924
    %v955 = vpack.c.b16 %v927, %v925
    %v956 = vpack.c.b16 %v930, %v928
    %v957 = vpack.c.b16 %v931, %v929
    %v958 = vpack.c.b16 %v934, %v932
    %v959 = vpack.c.b16 %v935, %v933
    %v960 = vpack.c.b16 %v938, %v936
    %v961 = vpack.c.b16 %v939, %v937
    %v962 = vpack.c.b16 %v942, %v940
    %v963 = vpack.c.b16 %v943, %v941
    %v964 = vpack.c.b16 %v946, %v944
    %v965 = vpack.c.b16 %v947, %v945
    %v966 = vpack.c.b16 %v950, %v948
    %v967 = vpack.c.b16 %v951, %v949
    %984 = vmatprep.subr.bf16.mxu0 %v953
    %985 = vmatpush1.bf16.msra.mxu0 %v952
    %986 = vmatprep.subr.bf16.mxu0 %v955
    %987 = vmatpush1.bf16.msra.mxu0 %v954
    %988 = vmatprep.subr.bf16.mxu0 %v957
    %989 = vmatpush1.bf16.msra.mxu0 %v956
    %990 = vmatprep.subr.bf16.mxu0 %v959
    %991 = vmatpush1.bf16.msra.mxu0 %v958
    %992 = vmatprep.subr.bf16.mxu0 %v961
    %993 = vmatpush1.bf16.msra.mxu0 %v960
    %994 = vmatprep.subr.bf16.mxu0 %v963
    %995 = vmatpush1.bf16.msra.mxu0 %v962
    %996 = vmatprep.subr.bf16.mxu0 %v965
    %997 = vmatpush1.bf16.msra.mxu0 %v964
    %998 = vmatprep.subr.bf16.mxu0 %v967
    %999 = vmatpush1.bf16.msra.mxu0 %v966
    %1000 = vmatprep.subr.bf16.mxu0 0
    %1001 = vmatpush1.bf16.msra.mxu0 0
    %1002 = vmatprep.subr.bf16.mxu0 0
    %1003 = vmatpush1.bf16.msra.mxu0 0
    %1004 = vmatprep.subr.bf16.mxu0 0
    %1005 = vmatpush1.bf16.msra.mxu0 0
    %1006 = vmatprep.subr.bf16.mxu0 0
    %1007 = vmatpush1.bf16.msra.mxu0 0
    %1008 = vmatprep.subr.bf16.mxu0 0
    %1009 = vmatpush1.bf16.msra.mxu0 0
    %1010 = vmatprep.subr.bf16.mxu0 0
    %1011 = vmatpush1.bf16.msra.mxu0 0
    %1012 = vmatprep.subr.bf16.mxu0 0
    %1013 = vmatpush1.bf16.msra.mxu0 0
    %1014 = vmatprep.subr.bf16.mxu0 0
    %1015 = vmatpush1.bf16.msra.mxu0 0
    %1016 = vmatprep.mubr.bf16.mxu0 0
    %1017 = vmatmul.mubr.bf16.gmra.mrb[0].mxu0 %v887
    %v1018 = vpop.f32.mrb[0].mxu0
    %v1019 = vadd.f32 0.0, %v1018
    %v1020 = vpop.f32.mrb[0].mxu0
    %v1021 = vadd.f32 0.0, %v1020
    %v1022 = vpop.f32.mrb[0].mxu0
    %v1023 = vpop.f32.mrb[0].mxu0
    %1024 = vdwg.mxu0
    %v1025 = vld [vmem:[#allocation8 + $0xf] sm:$0x1]
    %v1026 = vlaneseq
    %v1027 = vshrl.u32 %v1026, 7
    %v1028 = vsub.s32 0, %v1027
    %v1029 = vrot.slane %v1025, %v1028
    %v1030 = vadd.f32 %v1019, %v1029
    %1031 = vst [vmem:[#allocation11] sm:$0xff] %v1030
    %v1032 = vld [vmem:[#allocation8 + $0x10] sm:$0x1]
    %v1033 = vlaneseq
    %v1034 = vshrl.u32 %v1033, 7
    %v1035 = vsub.s32 0, %v1034
    %v1036 = vrot.slane %v1032, %v1035
    %v1037 = vadd.f32 %v1021, %v1036
    %1038 = vst [vmem:[#allocation12] sm:$0xff] %v1037
    // Predicated region
    $region42: #{tpu_custom_call.1} parent=1 // pred_check
      _
    $region43: #{tpu_custom_call.1} parent=1 // pred_check_branch
      %1040 = sbr.rel (0) target = $region45
    $region44: #{tpu_custom_call.1} parent=1 // pred_region
      %s1042 = ssub.s32 128, 128
      %1043 = vsyncadd [#allocation4], %s1042
      %s1045 = sshll.u32 [#allocation11], 4
      %s1046 = int_to_ptr.vmem [resolvable:$true] %s1045
      %1048 = dma.vmem_to_hbm [thread:$0]  %s1046, 128, %s5, [#allocation4]
    $region45: #{tpu_custom_call.1} parent=1 // pred_fallthru
      _
    // Predicated region
    $region46: #{tpu_custom_call.1} parent=1 // pred_check
      _
    $region47: #{tpu_custom_call.1} parent=1 // pred_check_branch
      %1050 = sbr.rel (0) target = $region49
    $region48: #{tpu_custom_call.1} parent=1 // pred_region
      %s1052 = ssub.s32 128, 128
      %1053 = vsyncadd [#allocation13], %s1052
      %s1055 = sshll.u32 [#allocation12], 4
      %s1056 = int_to_ptr.vmem [resolvable:$true] %s1055
      %1058 = dma.vmem_to_hbm [thread:$0]  %s1056, 128, %s6, [#allocation13]
    $region49: #{tpu_custom_call.1} parent=1 // pred_fallthru
      _
    // Predicated region
    $region50: #{tpu_custom_call.1} parent=1 // pred_check
      _
    $region51: #{tpu_custom_call.1} parent=1 // pred_check_branch
      %1060 = sbr.rel (0) target = $region53
    $region52: #{tpu_custom_call.1} parent=1 // pred_region
      %1061 = dma.done [#allocation4], 128
    $region53: #{tpu_custom_call.1} parent=1 // pred_fallthru
      _
    // Predicated region
    $region54: #{tpu_custom_call.1} parent=1 // pred_check
      _
    $region55: #{tpu_custom_call.1} parent=1 // pred_check_branch
      %1063 = sbr.rel (0) target = $region57
    $region56: #{tpu_custom_call.1} parent=1 // pred_region
      %1064 = dma.done [#allocation13], 128
    $region57: #{tpu_custom_call.1} parent=1 // pred_fallthru
      _
    %1065 = vsyncpa [#allocation3], 1
    %1066 = vsyncpa [#allocation6], 1
    %1067 = vsyncpa [#allocation9], 1
    %1068 = vsyncpa [#allocation4], 1
    %1069 = vsyncpa [#allocation13], 1

</llo_original>
